<compile_context>
chip_gen: v7x
topology: tpu7x:2x2x1
jax: 0.10.0
libtpu: 0.0.40
codegen_flags: <defaults>
</compile_context>

<pallas_src>
import jax
import jax.numpy as jnp
from jax import lax
from jax.experimental import pallas as pl
from jax.experimental.pallas import tpu as pltpu

HIDDEN = 128
N_ITEM = 5
RANGE_COLOR = 5
INPUT_STATE_SIZE = 1 + (RANGE_COLOR + 1 + N_ITEM) * N_ITEM  # 56
# Narrow combined head output: lanes [0,5) = probs, [5,10) = value, rest zeros.
OUT_PAD = 16


def _round_up(n, m):
    return ((n + m - 1) // m) * m


def _actor_critic_kernel(x_ref, w1_ref, b1_ref, wh_ref, bh_ref, out_ref):
    # dense + relu: MXU matmul (bf16 operands by default), f32 accumulation.
    x = x_ref[...]                                                 # (TB, F)
    h = jnp.dot(x, w1_ref[...], preferred_element_type=jnp.float32)
    h = jnp.maximum(h + b1_ref[...], 0.0)                          # (TB, H) f32

    # Fused policy+value heads: one MXU push into a narrow (TB, OUT_PAD) tile.
    y = jnp.dot(h.astype(wh_ref.dtype), wh_ref[...],
                preferred_element_type=jnp.float32)
    y = y + bh_ref[...]                                            # (TB, OUT_PAD)

    # Numerically stable softmax restricted to the first N_ITEM lanes.
    lane = lax.broadcasted_iota(jnp.int32, y.shape, 1)
    is_logit = lane < N_ITEM
    masked = jnp.where(is_logit, y, -jnp.inf)
    m = jnp.max(masked, axis=-1, keepdims=True)
    e = jnp.exp(masked - m)                        # padded lanes -> exactly 0
    denom = jnp.sum(e, axis=-1, keepdims=True)
    probs = e / denom                              # exact divide: rows sum to 1

    # One narrow store: [probs | value | zeros]. (Masked vst; same vreg/issue
    # cost as a 128-lane store, 8x fewer HBM bytes.)
    out_ref[...] = jnp.where(is_logit, probs, y).astype(out_ref.dtype)


def prepare_params(params, *, input_dtype=jnp.bfloat16):
    """One-time parameter prep, hoisted out of the per-call path.

    Fuses the two (HIDDEN, N_ITEM) heads into a single zero-padded
    (HIDDEN, OUT_PAD) weight/bias so both heads ride one MXU push, and casts
    the matmul operands (w1, wh) to `input_dtype` (bf16 by default; MXU
    accumulation in the kernel is always f32).
    """
    w1, b1, w2, b2, w3, b3 = params
    wh = jnp.zeros((HIDDEN, OUT_PAD), jnp.float32)
    wh = wh.at[:, :N_ITEM].set(w2).at[:, N_ITEM:2 * N_ITEM].set(w3)
    bh = jnp.zeros((1, OUT_PAD), jnp.float32)
    bh = bh.at[:, :N_ITEM].set(b2).at[:, N_ITEM:2 * N_ITEM].set(b3)
    return (w1.astype(input_dtype),
            jnp.reshape(b1, (1, HIDDEN)).astype(jnp.float32),
            wh.astype(input_dtype),
            bh)


def actor_critic_forward(x, prepared_params, *, tb=8192):
    """x: (B, INPUT_STATE_SIZE).  Returns (probs, value), each (B, N_ITEM) f32.

    Accuracy contract: with the default bf16 input path (f32 accumulation),
    probs/value match the f32 reference to ~1e-2; probs rows sum to 1 to f32
    rounding.  Use prepare_params(..., input_dtype=jnp.float32) for full f32.
    """
    w1, b1, wh, bh = prepared_params
    B, F = x.shape
    assert F == INPUT_STATE_SIZE

    x_in = x.astype(w1.dtype)

    # Batch tiling: large tiles amortize per-grid-step overhead, but keep the
    # grid at >= 2 steps when the batch allows so the "parallel" axis can be
    # split across the two v7x TensorCores.  No jnp.pad: ragged last tile is
    # handled by Pallas (OOB rows discarded on store).
    TB = max(8, min(tb, _round_up(pl.cdiv(B, 2), 8)))
    grid = (pl.cdiv(B, TB),)

    flops = 2 * B * (F * HIDDEN + HIDDEN * OUT_PAD)
    bytes_accessed = (
        x_in.size * x_in.dtype.itemsize
        + w1.size * w1.dtype.itemsize
        + b1.size * b1.dtype.itemsize
        + wh.size * wh.dtype.itemsize
        + bh.size * bh.dtype.itemsize
        + B * OUT_PAD * 4)

    out = pl.pallas_call(
        _actor_critic_kernel,
        out_shape=jax.ShapeDtypeStruct((B, OUT_PAD), jnp.float32),
        grid_spec=pltpu.PrefetchScalarGridSpec(
            num_scalar_prefetch=0,
            grid=grid,
            in_specs=[
                pl.BlockSpec((TB, F), lambda i: (i, 0)),             # x tile
                pl.BlockSpec((F, HIDDEN), lambda i: (0, 0)),         # w1 (resident)
                pl.BlockSpec((1, HIDDEN), lambda i: (0, 0)),         # b1 (resident)
                pl.BlockSpec((HIDDEN, OUT_PAD), lambda i: (0, 0)),   # fused heads W
                pl.BlockSpec((1, OUT_PAD), lambda i: (0, 0)),        # fused heads b
            ],
            out_specs=pl.BlockSpec((TB, OUT_PAD), lambda i: (i, 0)),
        ),
        compiler_params=pltpu.CompilerParams(
            dimension_semantics=("parallel",),
            vmem_limit_bytes=32 * 1024 * 1024),
        cost_estimate=pl.CostEstimate(
            flops=flops,
            transcendentals=B * OUT_PAD,   # exp over the whole 16-lane slab
            bytes_accessed=bytes_accessed),
    )(x_in, w1, b1, wh, bh)

    probs = out[:, :N_ITEM]
    value = out[:, N_ITEM:2 * N_ITEM]
    return probs, value


def init_params(key):
    """Deterministic init mimicking PyTorch nn.Linear (uniform +-1/sqrt(fan_in)).
    Weights stored as (in_features, out_features)."""
    k1, k2, k3, k4, k5, k6 = jax.random.split(key, 6)

    def uni(k, shape, fan_in):
        bound = 1.0 / jnp.sqrt(jnp.float32(fan_in))
        return jax.random.uniform(k, shape, jnp.float32, -bound, bound)

    w1 = uni(k1, (INPUT_STATE_SIZE, HIDDEN), INPUT_STATE_SIZE)
    b1 = uni(k2, (1, HIDDEN), INPUT_STATE_SIZE)
    w2 = uni(k3, (HIDDEN, N_ITEM), HIDDEN)
    b2 = uni(k4, (1, N_ITEM), HIDDEN)
    w3 = uni(k5, (HIDDEN, N_ITEM), HIDDEN)
    b3 = uni(k6, (1, N_ITEM), HIDDEN)
    return (w1, b1, w2, b2, w3, b3)


def reference_forward(x, params):
    """Pure-JAX f32 reference of the PyTorch forward for a sanity check."""
    w1, b1, w2, b2, w3, b3 = params
    h = jnp.maximum(x @ w1 + b1, 0.0)
    logits = h @ w2 + b2
    value = h @ w3 + b3
    return jax.nn.softmax(logits, axis=-1), value


if __name__ == "__main__":
    key = jax.random.PRNGKey(0)
    pkey, xkey = jax.random.split(key)
    params = init_params(pkey)

    B = 8  # small batch of state vectors
    x = jax.random.normal(xkey, (B, INPUT_STATE_SIZE), jnp.float32)

    prepared = prepare_params(params)     # one-time: fuse heads, cast to bf16
    fwd = jax.jit(actor_critic_forward)
    probs, value = fwd(x, prepared)
    jax.block_until_ready((probs, value))

    # correctness check against pure-JAX f32 reference
    ref_probs, ref_value = reference_forward(x, params)
    assert probs.shape == (B, N_ITEM) and value.shape == (B, N_ITEM)
    # bf16 input path (f32 MXU accumulation): ~1e-2 accuracy contract.
    assert jnp.allclose(value, ref_value, atol=3e-2, rtol=3e-2)
    assert jnp.allclose(probs, ref_probs, atol=3e-2, rtol=3e-2)
    # Exact softmax divide inside the kernel -> rows sum to 1 to f32 rounding.
    assert jnp.allclose(jnp.sum(probs, axis=-1), 1.0, atol=1e-4)
    assert bool(jnp.all(probs >= 0.0))

    print("KERNEL_OK")
</pallas_src>

<mosaic_0001>
module attributes {stable_mosaic.version = 11 : i64} {
  func.func @_actor_critic_kernel(%arg0: i32, %arg1: memref<8x56xbf16, #tpu.memory_space<vmem>>, %arg2: memref<56x128xbf16, #tpu.memory_space<vmem>>, %arg3: memref<1x128xf32, #tpu.memory_space<vmem>>, %arg4: memref<128x16xbf16, #tpu.memory_space<vmem>>, %arg5: memref<1x16xf32, #tpu.memory_space<vmem>>, %arg6: memref<8x16xf32, #tpu.memory_space<vmem>>) attributes {dimension_semantics = [#tpu.dimension_semantics<parallel>], iteration_bounds = array<i64: 1>, scalar_prefetch = 0 : i64, scratch_operands = 0 : i64, tpu.core_type = #tpu.core_type<tc>, window_params = [{transform_indices = @transform_0, window_bounds = array<i64: 8, 56>}, {pipeline_mode = #tpu.pipeline_mode<synchronous>, transform_indices = @transform_1, window_bounds = array<i64: 56, 128>}, {pipeline_mode = #tpu.pipeline_mode<synchronous>, transform_indices = @transform_2, window_bounds = array<i64: 1, 128>}, {pipeline_mode = #tpu.pipeline_mode<synchronous>, transform_indices = @transform_3, window_bounds = array<i64: 128, 16>}, {pipeline_mode = #tpu.pipeline_mode<synchronous>, transform_indices = @transform_4, window_bounds = array<i64: 1, 16>}, {transform_indices = @transform_5, window_bounds = array<i64: 8, 16>}]} {
    %c0 = arith.constant 0 : index
    %c0_0 = arith.constant 0 : index
    %0 = vector.load %arg1[%c0, %c0_0] : memref<8x56xbf16, #tpu.memory_space<vmem>>, vector<8x56xbf16>
    %c0_1 = arith.constant 0 : index
    %c0_2 = arith.constant 0 : index
    %1 = vector.load %arg2[%c0_1, %c0_2] : memref<56x128xbf16, #tpu.memory_space<vmem>>, vector<56x128xbf16>
    %cst = arith.constant dense<0.000000e+00> : vector<8x128xf32>
    %2 = tpu.matmul %0, %1, %cst {dimension_numbers = #tpu.dot_dimension_numbers<[1], [0], [0], [1], [0, 0, 1, 1], [], []>} : vector<8x56xbf16>, vector<56x128xbf16>, vector<8x128xf32> -> vector<8x128xf32>
    %c0_3 = arith.constant 0 : index
    %c0_4 = arith.constant 0 : index
    %3 = vector.load %arg3[%c0_3, %c0_4] : memref<1x128xf32, #tpu.memory_space<vmem>>, vector<1x128xf32>
    %4 = vector.broadcast %3 : vector<1x128xf32> to vector<8x128xf32>
    %5 = arith.addf %2, %4 : vector<8x128xf32>
    %cst_5 = arith.constant 0.000000e+00 : f32
    %6 = vector.broadcast %cst_5 : f32 to vector<8x128xf32>
    %7 = arith.maximumf %5, %6 : vector<8x128xf32>
    %8 = arith.truncf %7 : vector<8x128xf32> to vector<8x128xbf16>
    %c0_6 = arith.constant 0 : index
    %c0_7 = arith.constant 0 : index
    %9 = vector.load %arg4[%c0_6, %c0_7] : memref<128x16xbf16, #tpu.memory_space<vmem>>, vector<128x16xbf16>
    %cst_8 = arith.constant dense<0.000000e+00> : vector<8x16xf32>
    %10 = tpu.matmul %8, %9, %cst_8 {dimension_numbers = #tpu.dot_dimension_numbers<[1], [0], [0], [1], [0, 0, 1, 1], [], []>} : vector<8x128xbf16>, vector<128x16xbf16>, vector<8x16xf32> -> vector<8x16xf32>
    %c0_9 = arith.constant 0 : index
    %c0_10 = arith.constant 0 : index
    %11 = vector.load %arg5[%c0_9, %c0_10] : memref<1x16xf32, #tpu.memory_space<vmem>>, vector<1x16xf32>
    %12 = vector.broadcast %11 : vector<1x16xf32> to vector<8x16xf32>
    %13 = arith.addf %10, %12 : vector<8x16xf32>
    %14 = tpu.iota {dimensions = array<i32: 1>} : vector<8x16xi32>
    %c5_i32 = arith.constant 5 : i32
    %15 = vector.broadcast %c5_i32 : i32 to vector<8x16xi32>
    %16 = arith.cmpi slt, %14, %15 : vector<8x16xi32>
    %cst_11 = arith.constant 0xFF800000 : f32
    %17 = vector.broadcast %cst_11 : f32 to vector<8x16xf32>
    %18 = arith.select %16, %13, %17 : vector<8x16xi1>, vector<8x16xf32>
    %cst_12 = arith.constant dense<0xFF800000> : vector<8xf32>
    %19 = vector.multi_reduction <maximumf>, %18, %cst_12 [1] : vector<8x16xf32> to vector<8xf32>
    %20 = vector.shape_cast %19 : vector<8xf32> to vector<8x1xf32>
    %21 = vector.broadcast %20 : vector<8x1xf32> to vector<8x16xf32>
    %22 = arith.subf %18, %21 : vector<8x16xf32>
    %23 = math.exp %22 : vector<8x16xf32>
    %cst_13 = arith.constant dense<0.000000e+00> : vector<8xf32>
    %24 = vector.multi_reduction <add>, %23, %cst_13 [1] : vector<8x16xf32> to vector<8xf32>
    %25 = vector.shape_cast %24 : vector<8xf32> to vector<8x1xf32>
    %26 = vector.broadcast %25 : vector<8x1xf32> to vector<8x16xf32>
    %27 = arith.divf %23, %26 : vector<8x16xf32>
    %28 = arith.select %16, %27, %13 : vector<8x16xi1>, vector<8x16xf32>
    %c0_14 = arith.constant 0 : index
    %c0_15 = arith.constant 0 : index
    %29 = vector.load %arg6[%c0_14, %c0_15] : memref<8x16xf32, #tpu.memory_space<vmem>>, vector<8x16xf32>
    tpu.vector_store %arg6[%c0_14, %c0_15], %28 {strides = array<i32>} : memref<8x16xf32, #tpu.memory_space<vmem>>, vector<8x16xf32>,
    return
  }
  func.func @transform_0(%arg0: i32) -> (i32, i32) {
    %c0_i32 = arith.constant 0 : i32
    %c0_i32_0 = arith.constant 0 : i32
    return %arg0, %c0_i32 : i32, i32
  }
  func.func @transform_1(%arg0: i32) -> (i32, i32) {
    %c0_i32 = arith.constant 0 : i32
    %c0_i32_0 = arith.constant 0 : i32
    %c0_i32_1 = arith.constant 0 : i32
    return %c0_i32, %c0_i32_0 : i32, i32
  }
  func.func @transform_2(%arg0: i32) -> (i32, i32) {
    %c0_i32 = arith.constant 0 : i32
    %c0_i32_0 = arith.constant 0 : i32
    %c0_i32_1 = arith.constant 0 : i32
    return %c0_i32, %c0_i32_0 : i32, i32
  }
  func.func @transform_3(%arg0: i32) -> (i32, i32) {
    %c0_i32 = arith.constant 0 : i32
    %c0_i32_0 = arith.constant 0 : i32
    %c0_i32_1 = arith.constant 0 : i32
    return %c0_i32, %c0_i32_0 : i32, i32
  }
  func.func @transform_4(%arg0: i32) -> (i32, i32) {
    %c0_i32 = arith.constant 0 : i32
    %c0_i32_0 = arith.constant 0 : i32
    %c0_i32_1 = arith.constant 0 : i32
    return %c0_i32, %c0_i32_0 : i32, i32
  }
  func.func @transform_5(%arg0: i32) -> (i32, i32) {
    %c0_i32 = arith.constant 0 : i32
    %c0_i32_0 = arith.constant 0 : i32
    return %arg0, %c0_i32 : i32, i32
  }
}

</mosaic_0001>

<llo_original>
// kernel: actor_critic_forward.1
$region0: #{actor_critic_forward.1}
  #allocation0 [shape = 'u32[]', space=smem, size = 0x4, offset = 0x4, fixed_abs, tag = 'smem constant byte address 0x4 - core index']
  #allocation1 [shape = 'u32[144,128]{1,0:T(1,128)}', space=vmem, size = 0x12000, scoped, tag = 'internal scratch']
  %s0 = inlined_call_operand.vmem [shape: bf16[8,56], index: 0, kind: input, shape index: {}]
  %s1 = inlined_call_operand.vmem [shape: bf16[56,128], index: 1, kind: input, shape index: {}]
  %s2 = inlined_call_operand.vmem [shape: f32[1,128], index: 2, kind: input, shape index: {}]
  %s3 = inlined_call_operand.vmem [shape: bf16[128,16], index: 3, kind: input, shape index: {}]
  %s4 = inlined_call_operand.vmem [shape: f32[1,16], index: 4, kind: input, shape index: {}]
  %s5 = inlined_call_operand.vmem [shape: f32[8,16], index: 5, kind: output, shape index: {}]
  %s6 = sld [smem:[#allocation0]]
  $region30: #{actor_critic_forward.1} parent=0
    _
  %s8 = ssub.s32 1, %s6
  %s9 = scalar_select 0, %s8, %s6
  // Predicated region
  $region2: #{actor_critic_forward.1} parent=0 // pred_check
    _
  $region3: #{actor_critic_forward.1} parent=0 // pred_check_branch
    %11 = sbr.rel (0) target = $region5
  $region4: #{actor_critic_forward.1} parent=0 // pred_region
    _
  $region5: #{actor_critic_forward.1} parent=0 // pred_fallthru
    _
  // Predicated region
  $region6: #{actor_critic_forward.1} parent=0 // pred_check
    _
  $region7: #{actor_critic_forward.1} parent=0 // pred_check_branch
    %13 = sbr.rel (0) target = $region9
  $region8: #{actor_critic_forward.1} parent=0 // pred_region
    _
  $region9: #{actor_critic_forward.1} parent=0 // pred_fallthru
    _
  // Predicated region
  $region10: #{actor_critic_forward.1} parent=0 // pred_check
    _
  $region11: #{actor_critic_forward.1} parent=0 // pred_check_branch
    %15 = sbr.rel (0) target = $region13
  $region12: #{actor_critic_forward.1} parent=0 // pred_region
    _
  $region13: #{actor_critic_forward.1} parent=0 // pred_fallthru
    _
  // Predicated region
  $region14: #{actor_critic_forward.1} parent=0 // pred_check
    _
  $region15: #{actor_critic_forward.1} parent=0 // pred_check_branch
    %17 = sbr.rel (0) target = $region17
  $region16: #{actor_critic_forward.1} parent=0 // pred_region
    _
  $region17: #{actor_critic_forward.1} parent=0 // pred_fallthru
    _
  // Predicated region
  $region18: #{actor_critic_forward.1} parent=0 // pred_check
    _
  $region19: #{actor_critic_forward.1} parent=0 // pred_check_branch
    %19 = sbr.rel (0) target = $region21
  $region20: #{actor_critic_forward.1} parent=0 // pred_region
    _
  $region21: #{actor_critic_forward.1} parent=0 // pred_fallthru
    _
  %v21 = vld [vmem:[%s0] sm:$0xf]
  %v22 = vld [vmem:[%s1] sm:$0xf]
  %v23 = vld [vmem:[%s1 + $0x4] sm:$0xf]
  %v24 = vld [vmem:[%s1 + $0x8] sm:$0xf]
  %v25 = vld [vmem:[%s1 + $0xc] sm:$0xf]
  %v26 = vld [vmem:[%s1 + $0x10] sm:$0xf]
  %v27 = vld [vmem:[%s1 + $0x14] sm:$0xf]
  %v28 = vld [vmem:[%s1 + $0x18] sm:$0xf]
  %v29 = vld [vmem:[%s2] sm:$0x1]
  %v31 = vlaneseq
  %v32 = vshrl.u32 %v31, 7
  %v33 = vsub.s32 0, %v32
  %v34 = vrot.slane %v29, %v33
  %v43 = vunpack.c.l.b16 %v22
  %v44 = vunpack.c.l.b16 %v23
  %v45 = vunpack.c.l.b16 %v24
  %v46 = vunpack.c.l.b16 %v25
  %v47 = vunpack.c.l.b16 %v26
  %v48 = vunpack.c.l.b16 %v27
  %v49 = vunpack.c.l.b16 %v28
  %v50 = vpack.c.b16 %v44, %v43
  %v51 = vpack.c.b16 %v46, %v45
  %v52 = vpack.c.b16 %v48, %v47
  %v53 = vpack.c.b16 %v49, %v49
  %vm57 = vcmask 457728
  %v59 = vsel %vm57, %v21, 0
  %vm61 = vcmask 1043456
  %v63 = vsel %vm61, %v53, 0
  %65 = vmatprep.subr.bf16.mxu0 0
  %66 = vmatpush1.bf16.msra.mxu0 %v50
  %67 = vmatprep.subr.bf16.mxu0 0
  %68 = vmatpush1.bf16.msra.mxu0 %v51
  %69 = vmatprep.subr.bf16.mxu0 0
  %70 = vmatpush1.bf16.msra.mxu0 %v52
  %71 = vmatprep.subr.bf16.mxu0 0
  %72 = vmatpush1.bf16.msra.mxu0 %v63
  %73 = vmatprep.subr.bf16.mxu0 0
  %74 = vmatpush1.bf16.msra.mxu0 0
  %75 = vmatprep.subr.bf16.mxu0 0
  %76 = vmatpush1.bf16.msra.mxu0 0
  %77 = vmatprep.subr.bf16.mxu0 0
  %78 = vmatpush1.bf16.msra.mxu0 0
  %79 = vmatprep.subr.bf16.mxu0 0
  %80 = vmatpush1.bf16.msra.mxu0 0
  %81 = vmatprep.subr.bf16.mxu0 0
  %82 = vmatpush1.bf16.msra.mxu0 0
  %83 = vmatprep.subr.bf16.mxu0 0
  %84 = vmatpush1.bf16.msra.mxu0 0
  %85 = vmatprep.subr.bf16.mxu0 0
  %86 = vmatpush1.bf16.msra.mxu0 0
  %87 = vmatprep.subr.bf16.mxu0 0
  %88 = vmatpush1.bf16.msra.mxu0 0
  %89 = vmatprep.subr.bf16.mxu0 0
  %90 = vmatpush1.bf16.msra.mxu0 0
  %91 = vmatprep.subr.bf16.mxu0 0
  %92 = vmatpush1.bf16.msra.mxu0 0
  %93 = vmatprep.subr.bf16.mxu0 0
  %94 = vmatpush1.bf16.msra.mxu0 0
  %95 = vmatprep.subr.bf16.mxu0 0
  %96 = vmatpush1.bf16.msra.mxu0 0
  %97 = vmatprep.mubr.bf16.mxu0 0
  %98 = vmatmul.mubr.bf16.gmra.mrb[0].mxu0 %v59
  %v99 = vpop.f32.mrb[0].mxu0
  %v100 = vadd.f32 %v34, %v99
  %v101 = vpop.f32.mrb[0].mxu0
  %v102 = vpop.f32.mrb[0].mxu0
  %v103 = vpop.f32.mrb[0].mxu0
  %104 = vdwg.mxu0
  %v105 = vmax.f32 %v100, 0.0
  %v106 = vpack.c.bf16 %v105, %v105
  %v107 = vld [vmem:[%s3] sm:$0xf]
  %v108 = vld [vmem:[%s3 + $0x4] sm:$0xf]
  %v109 = vld [vmem:[%s3 + $0x8] sm:$0xf]
  %v110 = vld [vmem:[%s3 + $0xc] sm:$0xf]
  %v111 = vld [vmem:[%s3 + $0x10] sm:$0xf]
  %v112 = vld [vmem:[%s3 + $0x14] sm:$0xf]
  %v113 = vld [vmem:[%s3 + $0x18] sm:$0xf]
  %v114 = vld [vmem:[%s3 + $0x1c] sm:$0xf]
  %v115 = vld [vmem:[%s3 + $0x20] sm:$0xf]
  %v116 = vld [vmem:[%s3 + $0x24] sm:$0xf]
  %v117 = vld [vmem:[%s3 + $0x28] sm:$0xf]
  %v118 = vld [vmem:[%s3 + $0x2c] sm:$0xf]
  %v119 = vld [vmem:[%s3 + $0x30] sm:$0xf]
  %v120 = vld [vmem:[%s3 + $0x34] sm:$0xf]
  %v121 = vld [vmem:[%s3 + $0x38] sm:$0xf]
  %v122 = vld [vmem:[%s3 + $0x3c] sm:$0xf]
  %v123 = vld [vmem:[%s4] sm:$0x1]
  %v125 = vlaneseq
  %v126 = vshrl.u32 %v125, 7
  %v127 = vsub.s32 0, %v126
  %v128 = vrot.slane %v123, %v127
  %v146 = vunpack.c.l.b16 %v107
  %v147 = vunpack.c.l.b16 %v108
  %v148 = vunpack.c.l.b16 %v109
  %v149 = vunpack.c.l.b16 %v110
  %v150 = vunpack.c.l.b16 %v111
  %v151 = vunpack.c.l.b16 %v112
  %v152 = vunpack.c.l.b16 %v113
  %v153 = vunpack.c.l.b16 %v114
  %v154 = vunpack.c.l.b16 %v115
  %v155 = vunpack.c.l.b16 %v116
  %v156 = vunpack.c.l.b16 %v117
  %v157 = vunpack.c.l.b16 %v118
  %v158 = vunpack.c.l.b16 %v119
  %v159 = vunpack.c.l.b16 %v120
  %v160 = vunpack.c.l.b16 %v121
  %v161 = vunpack.c.l.b16 %v122
  %v162 = vpack.c.b16 %v147, %v146
  %v163 = vpack.c.b16 %v149, %v148
  %v164 = vpack.c.b16 %v151, %v150
  %v165 = vpack.c.b16 %v153, %v152
  %v166 = vpack.c.b16 %v155, %v154
  %v167 = vpack.c.b16 %v157, %v156
  %v168 = vpack.c.b16 %v159, %v158
  %v169 = vpack.c.b16 %v161, %v160
  %178 = vmatprep.subr.bf16.mxu0 0
  %179 = vmatpush1.bf16.msra.mxu0 %v162
  %180 = vmatprep.subr.bf16.mxu0 0
  %181 = vmatpush1.bf16.msra.mxu0 %v163
  %182 = vmatprep.subr.bf16.mxu0 0
  %183 = vmatpush1.bf16.msra.mxu0 %v164
  %184 = vmatprep.subr.bf16.mxu0 0
  %185 = vmatpush1.bf16.msra.mxu0 %v165
  %186 = vmatprep.subr.bf16.mxu0 0
  %187 = vmatpush1.bf16.msra.mxu0 %v166
  %188 = vmatprep.subr.bf16.mxu0 0
  %189 = vmatpush1.bf16.msra.mxu0 %v167
  %190 = vmatprep.subr.bf16.mxu0 0
  %191 = vmatpush1.bf16.msra.mxu0 %v168
  %192 = vmatprep.subr.bf16.mxu0 0
  %193 = vmatpush1.bf16.msra.mxu0 %v169
  %194 = vmatprep.subr.bf16.mxu0 0
  %195 = vmatpush1.bf16.msra.mxu0 0
  %196 = vmatprep.subr.bf16.mxu0 0
  %197 = vmatpush1.bf16.msra.mxu0 0
  %198 = vmatprep.subr.bf16.mxu0 0
  %199 = vmatpush1.bf16.msra.mxu0 0
  %200 = vmatprep.subr.bf16.mxu0 0
  %201 = vmatpush1.bf16.msra.mxu0 0
  %202 = vmatprep.subr.bf16.mxu0 0
  %203 = vmatpush1.bf16.msra.mxu0 0
  %204 = vmatprep.subr.bf16.mxu0 0
  %205 = vmatpush1.bf16.msra.mxu0 0
  %206 = vmatprep.subr.bf16.mxu0 0
  %207 = vmatpush1.bf16.msra.mxu0 0
  %208 = vmatprep.subr.bf16.mxu0 0
  %209 = vmatpush1.bf16.msra.mxu0 0
  %210 = vmatprep.mubr.bf16.mxu0 0
  %211 = vmatmul.mubr.bf16.gmra.mrb[0].mxu0 %v106
  %v212 = vpop.f32.mrb[0].mxu0
  %v213 = vadd.f32 %v128, %v212
  %v214 = vpop.f32.mrb[0].mxu0
  %v215 = vpop.f32.mrb[0].mxu0
  %v216 = vpop.f32.mrb[0].mxu0
  %217 = vdwg.mxu0
  %v218 = vlaneseq
  %v219 = vand.u32 %v218, 127
  %vm220 = vcmp.lt.s32.totalorder %v219, 5
  %v221 = vsel %vm220, %v213, -inf
  %vm222 = vcmask 130048
  %v223 = vsel %vm222, %v221, -inf
  %224 = vmax.xlane.f32.xlu0 %v223
  %v225 = vpop.xlane.xlu0 %224
  %v226 = vsub.f32 %v221, %v225
  %v227 = vmul.f32 %v226, 1.442695
  %v228 = vpow.pop %v227
  %v229 = vsel %vm222, %v228, 0.0
  %230 = vadd.xlane.f32.xlu0 %v229
  %v231 = vpop.xlane.xlu0 %230
  %v232 = vrcp.pop %v231
  %v233 = vmul.f32 %v228, %v232
  %v234 = vsel %vm220, %v233, %v213
  %235 = vst.msk [vmem:[%s5] sm:$0xff] %vm222, %v234
  // Predicated region
  $region22: #{actor_critic_forward.1} parent=0 // pred_check
    _
  $region23: #{actor_critic_forward.1} parent=0 // pred_check_branch
    %237 = sbr.rel (0) target = $region25
  $region24: #{actor_critic_forward.1} parent=0 // pred_region
    _
  $region25: #{actor_critic_forward.1} parent=0 // pred_fallthru
    _
  // Predicated region
  $region26: #{actor_critic_forward.1} parent=0 // pred_check
    _
  $region27: #{actor_critic_forward.1} parent=0 // pred_check_branch
    %239 = sbr.rel (0) target = $region29
  $region28: #{actor_critic_forward.1} parent=0 // pred_region
    _
  $region29: #{actor_critic_forward.1} parent=0 // pred_fallthru
    _

</llo_original>
